<compile_context>
chip_gen: v7x
topology: tpu7x:2x2x1
jax: 0.10.0
libtpu: 0.0.40
codegen_flags: <defaults>
</compile_context>

<pallas_src>
import functools

import jax
import jax.numpy as jnp
from jax.experimental import pallas as pl
from jax.experimental.pallas import tpu as pltpu

EMB_DIM = 768   # BERT hidden size (fixed by HeteGAT(input_dim=768) in the module)
SEG_BLK = 8     # segments processed per grid step (sublane-aligned output block)
LANE = 128      # TPU lane width — all matmul output widths padded to this


def _round_up(v, m):
    return ((v + m - 1) // m) * m


# --------------------------------------------------------------------------
# Pallas kernels
# --------------------------------------------------------------------------
def _linear_act_kernel(x_ref, w_ref, b_ref, o_ref, *, act):
    # bf16 x bf16 -> f32 accumulation on the MXU; activation in f32.
    y = jnp.dot(x_ref[...], w_ref[...], preferred_element_type=jnp.float32)
    y = y + b_ref[...]
    if act == "tanh":
        y = jnp.tanh(y)
    elif act == "relu":
        y = jnp.maximum(y, 0.0)
    o_ref[...] = y.astype(o_ref.dtype)


def linear(x, w, b_row, act="none"):
    """act(x @ w + b) as a single-block Pallas kernel.

    Operands are cast to bf16 (halves DMA bytes, native MXU dtype on v6e/v7x)
    with f32 accumulation.  Weights are expected pre-padded so the output width
    n is a multiple of 128 (lane-dense, unmasked stores).  Bias is pre-reshaped
    to (1, n) once at init time (hoisted out of the per-call path).
    TODO(synk): at real BERT sizes (S=512, large N) switch to a tiled
    (tm, tn, tk) grid with an f32 VMEM accumulator and explicit
    vmem_limit_bytes (v7x has only 64 MiB VMEM).
    """
    m, k = x.shape
    k2, n = w.shape
    assert k == k2 and b_row.shape == (1, n)
    vmem = pl.BlockSpec(memory_space=pltpu.MemorySpace.VMEM)
    return pl.pallas_call(
        functools.partial(_linear_act_kernel, act=act),
        out_shape=jax.ShapeDtypeStruct((m, n), jnp.float32),
        in_specs=[vmem, vmem, vmem],
        out_specs=vmem,
    )(x.astype(jnp.bfloat16), w.astype(jnp.bfloat16), b_row)


def _segmax_kernel(start_ref, end_ref, x_ref, o_ref):
    """out[g*8+j] = max over rows start[g*8+j]:end[g*8+j] of x, for j in 0..7."""
    g = pl.program_id(0)
    x = x_ref[...]                                              # (n, d), resident
    # (n, 1) row-index mask — broadcast over lanes inside jnp.where
    rows = jax.lax.broadcasted_iota(jnp.int32, (x.shape[0], 1), 0)
    outs = []
    for j in range(SEG_BLK):                                    # static unroll
        p = g * SEG_BLK + j
        s = start_ref[p]
        e = end_ref[p]
        mask = (rows >= s) & (rows < e)
        outs.append(jnp.max(jnp.where(mask, x, -jnp.inf), axis=0, keepdims=True))
    # single unmasked (8, d) sublane-aligned store
    o_ref[...] = jnp.concatenate(outs, axis=0)


def segmented_max(x, starts, ends):
    """out[p] = x[starts[p]:ends[p], :].max(axis=0)  ==  torch `poolings`.

    One pallas_call for ALL segments (whole batch); 8 segments per grid step.
    Padding segments use the valid dummy range (0, 1) so no -inf is produced;
    padded rows are sliced off before returning.
    TODO(synk): for long sequences, drive the input index_map from the
    scalar-prefetched starts so each step DMAs only the rows it needs instead
    of keeping the full (n, d) block resident.
    """
    n, d = x.shape
    p = len(starts)
    p_pad = _round_up(max(p, 1), SEG_BLK)
    starts = list(starts) + [0] * (p_pad - p)   # valid dummy segments, not empty
    ends = list(ends) + [1] * (p_pad - p)
    starts = jnp.asarray(starts, jnp.int32)
    ends = jnp.asarray(ends, jnp.int32)
    out = pl.pallas_call(
        _segmax_kernel,
        out_shape=jax.ShapeDtypeStruct((p_pad, d), x.dtype),
        grid_spec=pltpu.PrefetchScalarGridSpec(
            num_scalar_prefetch=2,
            grid=(p_pad // SEG_BLK,),
            in_specs=[pl.BlockSpec((n, d), lambda i, s_ref, e_ref: (0, 0))],
            out_specs=pl.BlockSpec((SEG_BLK, d), lambda i, s_ref, e_ref: (i, 0)),
        ),
        # output blocks are independent per step -> parallel (v7x megacore)
        compiler_params=pltpu.CompilerParams(dimension_semantics=("parallel",)),
    )(starts, ends, x)
    return out[:p]


# --------------------------------------------------------------------------
# Parameters (deterministic, synthetic; stored pre-padded & bias pre-reshaped)
# --------------------------------------------------------------------------
def init_params(key, vocab, seq, hidden):
    code_length = hidden * 4
    c_pad = _round_up(code_length, LANE)
    h_pad = _round_up(hidden, LANE)
    ks = jax.random.split(key, 6)
    p = {}
    # TODO(synk): BertModel weights/source unavailable; substitute a deterministic
    # token+position embedding table as the contextual-encoder output.
    p["tok_emb"] = 0.02 * jax.random.normal(ks[0], (vocab, EMB_DIM), jnp.float32)
    p["pos_emb"] = 0.02 * jax.random.normal(ks[1], (seq, EMB_DIM), jnp.float32)
    # TextNet.fc : Linear(768, 4*hidden), output lane-padded to c_pad
    fc_w = 0.02 * jax.random.normal(ks[2], (EMB_DIM, code_length), jnp.float32)
    p["fc_w_pad"] = jnp.zeros((EMB_DIM, c_pad), jnp.float32).at[:, :code_length].set(fc_w)
    p["fc_b_pad"] = jnp.zeros((1, c_pad), jnp.float32)
    # TODO(synk): HeteGAT source unavailable; substitute a linear+relu projection
    # 768 -> hidden (graph edges in Coomatrix are not used by the stand-in).
    # Output lane-padded to h_pad; padded cols are exact zeros after relu.
    gat_w = 0.05 * jax.random.normal(ks[3], (EMB_DIM, hidden), jnp.float32)
    p["gat_w_pad"] = jnp.zeros((EMB_DIM, h_pad), jnp.float32).at[:, :hidden].set(gat_w)
    p["gat_b_pad"] = jnp.zeros((1, h_pad), jnp.float32)
    # fusions_node : Linear(3*hidden, hidden), embedded in a zero-padded
    # (3*h_pad, h_pad) weight so the fused input stays lane-padded end to end.
    fus_w = 0.05 * jax.random.normal(ks[4], (hidden * 3, hidden), jnp.float32)
    fus_w_pad = jnp.zeros((3 * h_pad, h_pad), jnp.float32)
    for blk in range(3):
        fus_w_pad = fus_w_pad.at[blk * h_pad:blk * h_pad + hidden, :hidden].set(
            fus_w[blk * hidden:(blk + 1) * hidden])
    p["fus_w_pad"] = fus_w_pad
    p["fus_b_pad"] = jnp.zeros((1, h_pad), jnp.float32)
    return p


# --------------------------------------------------------------------------
# Forward pass
# --------------------------------------------------------------------------
def network_forward(params, inputs, hidden):
    tokens = inputs["text_batch_tensor"]        # (B, S) int32
    masks = inputs["mask_batch_tensor"]         # (B, S) int32
    B, S = tokens.shape
    h_pad = params["gat_w_pad"].shape[1]
    code_length = hidden * 4

    # ---- TextNet ---------------------------------------------------------
    # Stand-in contextual encoder output (see TODO in init_params).
    hs = (params["tok_emb"][tokens] + params["pos_emb"][None, :, :]) \
         * masks[..., None].astype(jnp.float32)                      # (B, S, 768)
    cls = hs[:, 0, :]                                                # (B, 768)
    bert_feature = linear(cls, params["fc_w_pad"], params["fc_b_pad"],
                          act="tanh")[:, :code_length]

    # ---- feature_matrix: ONE batched segmented-max over flattened hs ------
    hs_flat = hs.reshape(B * S, EMB_DIM)
    starts, ends = [], []
    for idx in range(inputs["batch_size"]):
        off = idx * S
        len1 = inputs["text1_length"][idx]
        len2 = inputs["text2_length"][idx]
        ph1 = inputs["text1_phrase"][idx]
        ph2 = inputs["text2_phrase"][idx]
        for i in range(len1):                       # text_a token nodes
            starts.append(off + 1 + i); ends.append(off + 2 + i)
        for i, ph in enumerate(ph1):                # text_a phrase nodes
            if len(ph) == 1:                        # NB: torch code indexes with the
                starts.append(off + 1 + i)          # phrase index i here (reproduced)
                ends.append(off + 2 + i)
            else:
                starts.append(off + 1 + ph[0]); ends.append(off + 1 + ph[-1] + 1)
        base = off + 2 + len1
        for j in range(len2):                       # text_b token nodes
            starts.append(base + j); ends.append(base + j + 1)
        for i, ph in enumerate(ph2):                # text_b phrase nodes
            if len(ph) == 1:
                starts.append(base + i); ends.append(base + i + 1)
            else:
                starts.append(base + ph[0]); ends.append(base + ph[-1] + 1)
        starts.append(off + 1); ends.append(off + 1 + len1)   # poolings(text_a)
        starts.append(base);    ends.append(base + len2)      # poolings(text_b)
    feature_matrix = segmented_max(hs_flat, starts, ends)     # (N_total, 768)

    # ---- HeteGAT (stand-in projection, lane-padded, see TODO) -------------
    gcn = linear(feature_matrix, params["gat_w_pad"], params["gat_b_pad"],
                 act="relu")                                  # (N_total, h_pad)

    # ---- GAT-side node selection (single gather) / pooling ----------------
    node_num = inputs["node_num"]                             # cumulative counts
    sel = jnp.asarray([node_num[i] - 2 for i in range(B)] +
                      [node_num[i] - 1 for i in range(B)], jnp.int32)
    sel_rows = jnp.take(gcn, sel, axis=0)
    a_rows, b_rows = sel_rows[:B], sel_rows[B:]

    starts2, ends2 = [], []
    last = 0
    for i in range(inputs["batch_size"]):
        len1 = inputs["text1_length"][i]
        len2 = inputs["text2_length"][i]
        np1 = len(inputs["text1_phrase"][i])
        word_a_pos = last
        phrase_a_pos = last + len1
        word_b_pos = phrase_a_pos + np1
        phrase_b_pos = word_b_pos + len2
        starts2 += [word_a_pos, phrase_a_pos, word_b_pos, phrase_b_pos]
        ends2 += [phrase_a_pos, word_b_pos, phrase_b_pos, node_num[i] - 2]
        last = node_num[i]
    pooled = segmented_max(gcn, starts2, ends2).reshape(B, 4, h_pad)
    word_a, phrase_a, word_b, phrase_b = (pooled[:, 0], pooled[:, 1],
                                          pooled[:, 2], pooled[:, 3])

    # ---- fusion + relu: a_s and b_s merged into ONE matmul -----------------
    # (F.dropout is identity at inference)
    fused_in = jnp.concatenate(
        [jnp.concatenate([a_rows, word_a, phrase_a], axis=-1),
         jnp.concatenate([b_rows, word_b, phrase_b], axis=-1)], axis=0)  # (2B, 3*h_pad)
    fused = linear(fused_in, params["fus_w_pad"], params["fus_b_pad"],
                   act="relu")                                           # (2B, h_pad)
    a_s = fused[:B, :hidden]
    b_s = fused[B:, :hidden]

    # TODO(synk): Prediction_Bert_GAT / Prediction_Bert sources unavailable;
    # return the fused node features and the BERT feature instead of logits.
    return a_s, b_s, bert_feature


# --------------------------------------------------------------------------
# Example run
# --------------------------------------------------------------------------
if __name__ == "__main__":
    B, S, HIDDEN, VOCAB = 2, 16, 32, 50

    key = jax.random.PRNGKey(0)
    k_tok, k_par = jax.random.split(key)

    tokens = jax.random.randint(k_tok, (B, S), 1, VOCAB, dtype=jnp.int32)

    # item 0: [CLS] a(4) [SEP] b(3) [SEP] pad ;  item 1: [CLS] a(3) [SEP] b(4) [SEP] pad
    text1_length = [4, 3]
    text2_length = [3, 4]
    text1_phrase = [[[0, 1], [2], [3]], [[0], [1, 2]]]
    text2_phrase = [[[0, 1, 2]], [[0, 1], [2, 3]]]

    masks_list, seg_list = [], []
    for i in range(B):
        valid = 3 + text1_length[i] + text2_length[i]
        masks_list.append([1] * valid + [0] * (S - valid))
        seg_list.append([0] * (2 + text1_length[i]) +
                        [1] * (1 + text2_length[i]) + [0] * (S - valid))
    masks = jnp.asarray(masks_list, jnp.int32)
    segments = jnp.asarray(seg_list, jnp.int32)

    # cumulative node counts: per-item = len1 + |ph1| + len2 + |ph2| + 2
    counts = [text1_length[i] + len(text1_phrase[i]) +
              text2_length[i] + len(text2_phrase[i]) + 2 for i in range(B)]
    node_num = []
    acc = 0
    for c in counts:
        acc += c
        node_num.append(acc)

    inputs = {
        "text_batch_tensor": tokens,
        "segment_batch_tensor": segments,
        "mask_batch_tensor": masks,
        "batch_size": B,
        "text1_length": text1_length,
        "text2_length": text2_length,
        "text1_phrase": text1_phrase,
        "text2_phrase": text2_phrase,
        "node_num": node_num,
        # TODO(synk): edge_index consumed only by the (unavailable) HeteGAT.
        "Coomatrix": jnp.zeros((2, 40), jnp.int32),
    }

    params = init_params(k_par, VOCAB, S, HIDDEN)
    a_s, b_s, bert_feature = network_forward(params, inputs, HIDDEN)
    jax.block_until_ready((a_s, b_s, bert_feature))

    assert a_s.shape == (B, HIDDEN)
    assert b_s.shape == (B, HIDDEN)
    assert bert_feature.shape == (B, HIDDEN * 4)
    print("KERNEL_OK")
</pallas_src>

<mosaic_0001>
module attributes {stable_mosaic.version = 11 : i64} {
  func.func @_linear_act_kernel(%arg0: memref<2x768xbf16, #tpu.memory_space<vmem>>, %arg1: memref<768x128xbf16, #tpu.memory_space<vmem>>, %arg2: memref<1x128xf32, #tpu.memory_space<vmem>>, %arg3: memref<2x128xf32, #tpu.memory_space<vmem>>) attributes {dimension_semantics = [], scalar_prefetch = 0 : i64, scratch_operands = 0 : i64, tpu.core_type = #tpu.core_type<tc>} {
    %c0 = arith.constant 0 : index
    %c0_0 = arith.constant 0 : index
    %0 = vector.load %arg0[%c0, %c0_0] : memref<2x768xbf16, #tpu.memory_space<vmem>>, vector<2x768xbf16>
    %c0_1 = arith.constant 0 : index
    %c0_2 = arith.constant 0 : index
    %1 = vector.load %arg1[%c0_1, %c0_2] : memref<768x128xbf16, #tpu.memory_space<vmem>>, vector<768x128xbf16>
    %cst = arith.constant dense<0.000000e+00> : vector<2x128xf32>
    %2 = tpu.matmul %0, %1, %cst {dimension_numbers = #tpu.dot_dimension_numbers<[1], [0], [0], [1], [0, 0, 1, 1], [], []>} : vector<2x768xbf16>, vector<768x128xbf16>, vector<2x128xf32> -> vector<2x128xf32>
    %c0_3 = arith.constant 0 : index
    %c0_4 = arith.constant 0 : index
    %3 = vector.load %arg2[%c0_3, %c0_4] : memref<1x128xf32, #tpu.memory_space<vmem>>, vector<1x128xf32>
    %4 = vector.broadcast %3 : vector<1x128xf32> to vector<2x128xf32>
    %5 = arith.addf %2, %4 : vector<2x128xf32>
    %6 = math.tanh %5 : vector<2x128xf32>
    %c0_5 = arith.constant 0 : index
    %c0_6 = arith.constant 0 : index
    %7 = vector.load %arg3[%c0_5, %c0_6] : memref<2x128xf32, #tpu.memory_space<vmem>>, vector<2x128xf32>
    tpu.vector_store %arg3[%c0_5, %c0_6], %6 {strides = array<i32>} : memref<2x128xf32, #tpu.memory_space<vmem>>, vector<2x128xf32>,
    return
  }
}

</mosaic_0001>

<llo_original>
// kernel: tpu_custom_call.1
$region0: #{tpu_custom_call.1}
  #allocation0 [shape = 'u32[]', space=smem, size = 0x4, offset = 0x4, fixed_abs, tag = 'smem constant byte address 0x4 - core index']
  #allocation1 [shape = 'u32[144,128]{1,0:T(1,128)}', space=vmem, size = 0x12000, scoped, tag = 'internal scratch']
  %s0 = inlined_call_operand.hbm [shape: bf16[2,768], index: 0, kind: input, shape index: {}]
  %s1 = inlined_call_operand.hbm [shape: bf16[768,128], index: 1, kind: input, shape index: {}]
  %s2 = inlined_call_operand.vmem [shape: f32[1,128], index: 2, kind: input, shape index: {}]
  %s3 = inlined_call_operand.hbm [shape: f32[2,128], index: 3, kind: output, shape index: {}]
  %s4 = sld [smem:[#allocation0]]
  $region30: #{tpu_custom_call.1} parent=0
    _
  %s6 = ssub.s32 1, %s4
  %s7 = scalar_select 0, %s6, %s4
  $region1: #{tpu_custom_call.1} parent=0
    #allocation2 [shape = 'u8[3072]{0}', space=vmem, size = 0xc00, scoped, tag = 'input window, operand 0, single buffered']
    #allocation3 [shape = 's32[1]{0}', space=sflag, size = 0x4, scoped, tag = 'scoped memory for tpu_custom_call.1']
    #allocation4 [shape = 's32[1]{0}', space=sflag, size = 0x4, scoped, tag = 'scoped memory for tpu_custom_call.1']
    #allocation5 [shape = 'u8[196608]{0}', space=vmem, size = 0x30000, scoped, tag = 'input window, operand 1, single buffered']
    #allocation6 [shape = 's32[1]{0}', space=sflag, size = 0x4, scoped, tag = 'scoped memory for tpu_custom_call.1']
    #allocation7 [shape = 'u8[1024]{0}', space=vmem, size = 0x400, scoped, tag = 'output window, operand 0, single buffered']
    %8 = vsyncpa [#allocation3], 0
    %9 = vsyncpa [#allocation6], 0
    %10 = vsyncpa [#allocation4], 0
    // Predicated region
    $region2: #{tpu_custom_call.1} parent=1 // pred_check
      _
    $region3: #{tpu_custom_call.1} parent=1 // pred_check_branch
      %12 = sbr.rel (0) target = $region5
    $region4: #{tpu_custom_call.1} parent=1 // pred_region
      %s14 = ssub.s32 96, 96
      %15 = vsyncadd [#allocation3], %s14
      %s17 = sshll.u32 [#allocation2], 4
      %s18 = int_to_ptr.vmem [resolvable:$true] %s17
      %20 = dma.hbm_to_vmem [thread:$0]  %s0, 96, %s18, [#allocation3]
    $region5: #{tpu_custom_call.1} parent=1 // pred_fallthru
      _
    // Predicated region
    $region6: #{tpu_custom_call.1} parent=1 // pred_check
      _
    $region7: #{tpu_custom_call.1} parent=1 // pred_check_branch
      %22 = sbr.rel (0) target = $region9
    $region8: #{tpu_custom_call.1} parent=1 // pred_region
      %s24 = ssub.s32 6144, 6144
      %25 = vsyncadd [#allocation6], %s24
      %s26 = sshll.u32 [#allocation5], 4
      %s27 = int_to_ptr.vmem [resolvable:$true] %s26
      %32 = dma.hbm_to_vmem [thread:$0]  %s1, 6144, %s27, [#allocation6], 64, 64, 4
    $region9: #{tpu_custom_call.1} parent=1 // pred_fallthru
      _
    // Predicated region
    $region10: #{tpu_custom_call.1} parent=1 // pred_check
      _
    $region11: #{tpu_custom_call.1} parent=1 // pred_check_branch
      %34 = sbr.rel (0) target = $region13
    $region12: #{tpu_custom_call.1} parent=1 // pred_region
      _
    $region13: #{tpu_custom_call.1} parent=1 // pred_fallthru
      _
    // Predicated region
    $region14: #{tpu_custom_call.1} parent=1 // pred_check
      _
    $region15: #{tpu_custom_call.1} parent=1 // pred_check_branch
      %36 = sbr.rel (0) target = $region17
    $region16: #{tpu_custom_call.1} parent=1 // pred_region
      %37 = dma.done [#allocation3], 96
    $region17: #{tpu_custom_call.1} parent=1 // pred_fallthru
      _
    // Predicated region
    $region18: #{tpu_custom_call.1} parent=1 // pred_check
      _
    $region19: #{tpu_custom_call.1} parent=1 // pred_check_branch
      %39 = sbr.rel (0) target = $region21
    $region20: #{tpu_custom_call.1} parent=1 // pred_region
      %40 = dma.done [#allocation6], 6144
    $region21: #{tpu_custom_call.1} parent=1 // pred_fallthru
      _
    %v42 = vld [vmem:[#allocation2] sm:$0x3f]
    %v43 = vld [vmem:[#allocation5] sm:$0xf]
    %v44 = vld [vmem:[#allocation5 + $0x4] sm:$0xf]
    %v45 = vld [vmem:[#allocation5 + $0x8] sm:$0xf]
    %v46 = vld [vmem:[#allocation5 + $0xc] sm:$0xf]
    %v47 = vld [vmem:[#allocation5 + $0x10] sm:$0xf]
    %v48 = vld [vmem:[#allocation5 + $0x14] sm:$0xf]
    %v49 = vld [vmem:[#allocation5 + $0x18] sm:$0xf]
    %v50 = vld [vmem:[#allocation5 + $0x1c] sm:$0xf]
    %v51 = vld [vmem:[#allocation5 + $0x20] sm:$0xf]
    %v52 = vld [vmem:[#allocation5 + $0x24] sm:$0xf]
    %v53 = vld [vmem:[#allocation5 + $0x28] sm:$0xf]
    %v54 = vld [vmem:[#allocation5 + $0x2c] sm:$0xf]
    %v55 = vld [vmem:[#allocation5 + $0x30] sm:$0xf]
    %v56 = vld [vmem:[#allocation5 + $0x34] sm:$0xf]
    %v57 = vld [vmem:[#allocation5 + $0x38] sm:$0xf]
    %v58 = vld [vmem:[#allocation5 + $0x3c] sm:$0xf]
    %v59 = vld [vmem:[#allocation5 + $0x40] sm:$0xf]
    %v60 = vld [vmem:[#allocation5 + $0x44] sm:$0xf]
    %v61 = vld [vmem:[#allocation5 + $0x48] sm:$0xf]
    %v62 = vld [vmem:[#allocation5 + $0x4c] sm:$0xf]
    %v63 = vld [vmem:[#allocation5 + $0x50] sm:$0xf]
    %v64 = vld [vmem:[#allocation5 + $0x54] sm:$0xf]
    %v65 = vld [vmem:[#allocation5 + $0x58] sm:$0xf]
    %v66 = vld [vmem:[#allocation5 + $0x5c] sm:$0xf]
    %v67 = vld [vmem:[#allocation5 + $0x60] sm:$0xf]
    %v68 = vld [vmem:[#allocation5 + $0x64] sm:$0xf]
    %v69 = vld [vmem:[#allocation5 + $0x68] sm:$0xf]
    %v70 = vld [vmem:[#allocation5 + $0x6c] sm:$0xf]
    %v71 = vld [vmem:[#allocation5 + $0x70] sm:$0xf]
    %v72 = vld [vmem:[#allocation5 + $0x74] sm:$0xf]
    %v73 = vld [vmem:[#allocation5 + $0x78] sm:$0xf]
    %v74 = vld [vmem:[#allocation5 + $0x7c] sm:$0xf]
    %v75 = vld [vmem:[#allocation5 + $0x80] sm:$0xf]
    %v76 = vld [vmem:[#allocation5 + $0x84] sm:$0xf]
    %v77 = vld [vmem:[#allocation5 + $0x88] sm:$0xf]
    %v78 = vld [vmem:[#allocation5 + $0x8c] sm:$0xf]
    %v79 = vld [vmem:[#allocation5 + $0x90] sm:$0xf]
    %v80 = vld [vmem:[#allocation5 + $0x94] sm:$0xf]
    %v81 = vld [vmem:[#allocation5 + $0x98] sm:$0xf]
    %v82 = vld [vmem:[#allocation5 + $0x9c] sm:$0xf]
    %v83 = vld [vmem:[#allocation5 + $0xa0] sm:$0xf]
    %v84 = vld [vmem:[#allocation5 + $0xa4] sm:$0xf]
    %v85 = vld [vmem:[#allocation5 + $0xa8] sm:$0xf]
    %v86 = vld [vmem:[#allocation5 + $0xac] sm:$0xf]
    %v87 = vld [vmem:[#allocation5 + $0xb0] sm:$0xf]
    %v88 = vld [vmem:[#allocation5 + $0xb4] sm:$0xf]
    %v89 = vld [vmem:[#allocation5 + $0xb8] sm:$0xf]
    %v90 = vld [vmem:[#allocation5 + $0xbc] sm:$0xf]
    %v91 = vld [vmem:[#allocation5 + $0xc0] sm:$0xf]
    %v92 = vld [vmem:[#allocation5 + $0xc4] sm:$0xf]
    %v93 = vld [vmem:[#allocation5 + $0xc8] sm:$0xf]
    %v94 = vld [vmem:[#allocation5 + $0xcc] sm:$0xf]
    %v95 = vld [vmem:[#allocation5 + $0xd0] sm:$0xf]
    %v96 = vld [vmem:[#allocation5 + $0xd4] sm:$0xf]
    %v97 = vld [vmem:[#allocation5 + $0xd8] sm:$0xf]
    %v98 = vld [vmem:[#allocation5 + $0xdc] sm:$0xf]
    %v99 = vld [vmem:[#allocation5 + $0xe0] sm:$0xf]
    %v100 = vld [vmem:[#allocation5 + $0xe4] sm:$0xf]
    %v101 = vld [vmem:[#allocation5 + $0xe8] sm:$0xf]
    %v102 = vld [vmem:[#allocation5 + $0xec] sm:$0xf]
    %v103 = vld [vmem:[#allocation5 + $0xf0] sm:$0xf]
    %v104 = vld [vmem:[#allocation5 + $0xf4] sm:$0xf]
    %v105 = vld [vmem:[#allocation5 + $0xf8] sm:$0xf]
    %v106 = vld [vmem:[#allocation5 + $0xfc] sm:$0xf]
    %v107 = vld [vmem:[#allocation5 + $0x100] sm:$0xf]
    %v108 = vld [vmem:[#allocation5 + $0x104] sm:$0xf]
    %v109 = vld [vmem:[#allocation5 + $0x108] sm:$0xf]
    %v110 = vld [vmem:[#allocation5 + $0x10c] sm:$0xf]
    %v111 = vld [vmem:[#allocation5 + $0x110] sm:$0xf]
    %v112 = vld [vmem:[#allocation5 + $0x114] sm:$0xf]
    %v113 = vld [vmem:[#allocation5 + $0x118] sm:$0xf]
    %v114 = vld [vmem:[#allocation5 + $0x11c] sm:$0xf]
    %v115 = vld [vmem:[#allocation5 + $0x120] sm:$0xf]
    %v116 = vld [vmem:[#allocation5 + $0x124] sm:$0xf]
    %v117 = vld [vmem:[#allocation5 + $0x128] sm:$0xf]
    %v118 = vld [vmem:[#allocation5 + $0x12c] sm:$0xf]
    %v119 = vld [vmem:[#allocation5 + $0x130] sm:$0xf]
    %v120 = vld [vmem:[#allocation5 + $0x134] sm:$0xf]
    %v121 = vld [vmem:[#allocation5 + $0x138] sm:$0xf]
    %v122 = vld [vmem:[#allocation5 + $0x13c] sm:$0xf]
    %v123 = vld [vmem:[#allocation5 + $0x140] sm:$0xf]
    %v124 = vld [vmem:[#allocation5 + $0x144] sm:$0xf]
    %v125 = vld [vmem:[#allocation5 + $0x148] sm:$0xf]
    %v126 = vld [vmem:[#allocation5 + $0x14c] sm:$0xf]
    %v127 = vld [vmem:[#allocation5 + $0x150] sm:$0xf]
    %v128 = vld [vmem:[#allocation5 + $0x154] sm:$0xf]
    %v129 = vld [vmem:[#allocation5 + $0x158] sm:$0xf]
    %v130 = vld [vmem:[#allocation5 + $0x15c] sm:$0xf]
    %v131 = vld [vmem:[#allocation5 + $0x160] sm:$0xf]
    %v132 = vld [vmem:[#allocation5 + $0x164] sm:$0xf]
    %v133 = vld [vmem:[#allocation5 + $0x168] sm:$0xf]
    %v134 = vld [vmem:[#allocation5 + $0x16c] sm:$0xf]
    %v135 = vld [vmem:[#allocation5 + $0x170] sm:$0xf]
    %v136 = vld [vmem:[#allocation5 + $0x174] sm:$0xf]
    %v137 = vld [vmem:[#allocation5 + $0x178] sm:$0xf]
    %v138 = vld [vmem:[#allocation5 + $0x17c] sm:$0xf]
    %v139 = vld [vmem:[%s2] sm:$0x1]
    %v141 = vlaneseq
    %v142 = vshrl.u32 %v141, 7
    %v143 = vsub.s32 0, %v142
    %v144 = vrot.slane %v139, %v143
    %v147 = vcombine.high %v42, %v42
    %v149 = vunpack.c.l.s4 1966171168
    %v150 = vunpack.c.0.s8 %v149
    %v151 = vlaneseq
    %v152 = vshrl.u32 %v151, 7
    %v153 = vsub.s32 %v150, %v152
    %v154 = vrot.slane %v42, %v153
    %v156 = vunpack.c.l.s4 1966171168
    %v157 = vunpack.c.0.s8 %v156
    %v158 = vlaneseq
    %v159 = vshrl.u32 %v158, 7
    %v160 = vsub.s32 %v157, %v159
    %v161 = vrot.slane %v147, %v160
    %v162 = vcombine.high %v154, %v154
    %v163 = vcombine.high %v161, %v161
    %v165 = vunpack.c.l.s4 1966171168
    %v166 = vunpack.c.0.s8 %v165
    %v167 = vlaneseq
    %v168 = vshrl.u32 %v167, 7
    %v169 = vsub.s32 %v166, %v168
    %v170 = vrot.slane %v154, %v169
    %v172 = vunpack.c.l.s4 1966171168
    %v173 = vunpack.c.0.s8 %v172
    %v174 = vlaneseq
    %v175 = vshrl.u32 %v174, 7
    %v176 = vsub.s32 %v173, %v175
    %v177 = vrot.slane %v161, %v176
    %v179 = vunpack.c.l.s4 1966171168
    %v180 = vunpack.c.0.s8 %v179
    %v181 = vlaneseq
    %v182 = vshrl.u32 %v181, 7
    %v183 = vsub.s32 %v180, %v182
    %v184 = vrot.slane %v162, %v183
    %v186 = vunpack.c.l.s4 1966171168
    %v187 = vunpack.c.0.s8 %v186
    %v188 = vlaneseq
    %v189 = vshrl.u32 %v188, 7
    %v190 = vsub.s32 %v187, %v189
    %v191 = vrot.slane %v163, %v190
    %v192 = vcombine.high %v170, %v170
    %v193 = vcombine.high %v184, %v184
    %v296 = vunpack.c.l.b16 %v43
    %v297 = vunpack.c.l.b16 %v44
    %v298 = vunpack.c.l.b16 %v45
    %v299 = vunpack.c.l.b16 %v46
    %v300 = vunpack.c.l.b16 %v47
    %v301 = vunpack.c.l.b16 %v48
    %v302 = vunpack.c.l.b16 %v49
    %v303 = vunpack.c.l.b16 %v50
    %v304 = vunpack.c.l.b16 %v51
    %v305 = vunpack.c.l.b16 %v52
    %v306 = vunpack.c.l.b16 %v53
    %v307 = vunpack.c.l.b16 %v54
    %v308 = vunpack.c.l.b16 %v55
    %v309 = vunpack.c.l.b16 %v56
    %v310 = vunpack.c.l.b16 %v57
    %v311 = vunpack.c.l.b16 %v58
    %v312 = vunpack.c.l.b16 %v59
    %v313 = vunpack.c.l.b16 %v60
    %v314 = vunpack.c.l.b16 %v61
    %v315 = vunpack.c.l.b16 %v62
    %v316 = vunpack.c.l.b16 %v63
    %v317 = vunpack.c.l.b16 %v64
    %v318 = vunpack.c.l.b16 %v65
    %v319 = vunpack.c.l.b16 %v66
    %v320 = vunpack.c.l.b16 %v67
    %v321 = vunpack.c.l.b16 %v68
    %v322 = vunpack.c.l.b16 %v69
    %v323 = vunpack.c.l.b16 %v70
    %v324 = vunpack.c.l.b16 %v71
    %v325 = vunpack.c.l.b16 %v72
    %v326 = vunpack.c.l.b16 %v73
    %v327 = vunpack.c.l.b16 %v74
    %v328 = vunpack.c.l.b16 %v75
    %v329 = vunpack.c.l.b16 %v76
    %v330 = vunpack.c.l.b16 %v77
    %v331 = vunpack.c.l.b16 %v78
    %v332 = vunpack.c.l.b16 %v79
    %v333 = vunpack.c.l.b16 %v80
    %v334 = vunpack.c.l.b16 %v81
    %v335 = vunpack.c.l.b16 %v82
    %v336 = vunpack.c.l.b16 %v83
    %v337 = vunpack.c.l.b16 %v84
    %v338 = vunpack.c.l.b16 %v85
    %v339 = vunpack.c.l.b16 %v86
    %v340 = vunpack.c.l.b16 %v87
    %v341 = vunpack.c.l.b16 %v88
    %v342 = vunpack.c.l.b16 %v89
    %v343 = vunpack.c.l.b16 %v90
    %v344 = vunpack.c.l.b16 %v91
    %v345 = vunpack.c.l.b16 %v92
    %v346 = vunpack.c.l.b16 %v93
    %v347 = vunpack.c.l.b16 %v94
    %v348 = vunpack.c.l.b16 %v95
    %v349 = vunpack.c.l.b16 %v96
    %v350 = vunpack.c.l.b16 %v97
    %v351 = vunpack.c.l.b16 %v98
    %v352 = vunpack.c.l.b16 %v99
    %v353 = vunpack.c.l.b16 %v100
    %v354 = vunpack.c.l.b16 %v101
    %v355 = vunpack.c.l.b16 %v102
    %v356 = vunpack.c.l.b16 %v103
    %v357 = vunpack.c.l.b16 %v104
    %v358 = vunpack.c.l.b16 %v105
    %v359 = vunpack.c.l.b16 %v106
    %v360 = vunpack.c.l.b16 %v107
    %v361 = vunpack.c.l.b16 %v108
    %v362 = vunpack.c.l.b16 %v109
    %v363 = vunpack.c.l.b16 %v110
    %v364 = vunpack.c.l.b16 %v111
    %v365 = vunpack.c.l.b16 %v112
    %v366 = vunpack.c.l.b16 %v113
    %v367 = vunpack.c.l.b16 %v114
    %v368 = vunpack.c.l.b16 %v115
    %v369 = vunpack.c.l.b16 %v116
    %v370 = vunpack.c.l.b16 %v117
    %v371 = vunpack.c.l.b16 %v118
    %v372 = vunpack.c.l.b16 %v119
    %v373 = vunpack.c.l.b16 %v120
    %v374 = vunpack.c.l.b16 %v121
    %v375 = vunpack.c.l.b16 %v122
    %v376 = vunpack.c.l.b16 %v123
    %v377 = vunpack.c.l.b16 %v124
    %v378 = vunpack.c.l.b16 %v125
    %v379 = vunpack.c.l.b16 %v126
    %v380 = vunpack.c.l.b16 %v127
    %v381 = vunpack.c.l.b16 %v128
    %v382 = vunpack.c.l.b16 %v129
    %v383 = vunpack.c.l.b16 %v130
    %v384 = vunpack.c.l.b16 %v131
    %v385 = vunpack.c.l.b16 %v132
    %v386 = vunpack.c.l.b16 %v133
    %v387 = vunpack.c.l.b16 %v134
    %v388 = vunpack.c.l.b16 %v135
    %v389 = vunpack.c.l.b16 %v136
    %v390 = vunpack.c.l.b16 %v137
    %v391 = vunpack.c.l.b16 %v138
    %v392 = vpack.c.b16 %v297, %v296
    %v393 = vpack.c.b16 %v299, %v298
    %v394 = vpack.c.b16 %v301, %v300
    %v395 = vpack.c.b16 %v303, %v302
    %v396 = vpack.c.b16 %v305, %v304
    %v397 = vpack.c.b16 %v307, %v306
    %v398 = vpack.c.b16 %v309, %v308
    %v399 = vpack.c.b16 %v311, %v310
    %v400 = vpack.c.b16 %v313, %v312
    %v401 = vpack.c.b16 %v315, %v314
    %v402 = vpack.c.b16 %v317, %v316
    %v403 = vpack.c.b16 %v319, %v318
    %v404 = vpack.c.b16 %v321, %v320
    %v405 = vpack.c.b16 %v323, %v322
    %v406 = vpack.c.b16 %v325, %v324
    %v407 = vpack.c.b16 %v327, %v326
    %v408 = vpack.c.b16 %v329, %v328
    %v409 = vpack.c.b16 %v331, %v330
    %v410 = vpack.c.b16 %v333, %v332
    %v411 = vpack.c.b16 %v335, %v334
    %v412 = vpack.c.b16 %v337, %v336
    %v413 = vpack.c.b16 %v339, %v338
    %v414 = vpack.c.b16 %v341, %v340
    %v415 = vpack.c.b16 %v343, %v342
    %v416 = vpack.c.b16 %v345, %v344
    %v417 = vpack.c.b16 %v347, %v346
    %v418 = vpack.c.b16 %v349, %v348
    %v419 = vpack.c.b16 %v351, %v350
    %v420 = vpack.c.b16 %v353, %v352
    %v421 = vpack.c.b16 %v355, %v354
    %v422 = vpack.c.b16 %v357, %v356
    %v423 = vpack.c.b16 %v359, %v358
    %v424 = vpack.c.b16 %v361, %v360
    %v425 = vpack.c.b16 %v363, %v362
    %v426 = vpack.c.b16 %v365, %v364
    %v427 = vpack.c.b16 %v367, %v366
    %v428 = vpack.c.b16 %v369, %v368
    %v429 = vpack.c.b16 %v371, %v370
    %v430 = vpack.c.b16 %v373, %v372
    %v431 = vpack.c.b16 %v375, %v374
    %v432 = vpack.c.b16 %v377, %v376
    %v433 = vpack.c.b16 %v379, %v378
    %v434 = vpack.c.b16 %v381, %v380
    %v435 = vpack.c.b16 %v383, %v382
    %v436 = vpack.c.b16 %v385, %v384
    %v437 = vpack.c.b16 %v387, %v386
    %v438 = vpack.c.b16 %v389, %v388
    %v439 = vpack.c.b16 %v391, %v390
    %488 = vmatprep.subr.bf16.mxu0 0
    %489 = vmatpush1.bf16.msra.mxu0 %v392
    %490 = vmatprep.subr.bf16.mxu0 0
    %491 = vmatpush1.bf16.msra.mxu0 %v393
    %492 = vmatprep.subr.bf16.mxu0 0
    %493 = vmatpush1.bf16.msra.mxu0 %v394
    %494 = vmatprep.subr.bf16.mxu0 0
    %495 = vmatpush1.bf16.msra.mxu0 %v395
    %496 = vmatprep.subr.bf16.mxu0 0
    %497 = vmatpush1.bf16.msra.mxu0 %v396
    %498 = vmatprep.subr.bf16.mxu0 0
    %499 = vmatpush1.bf16.msra.mxu0 %v397
    %500 = vmatprep.subr.bf16.mxu0 0
    %501 = vmatpush1.bf16.msra.mxu0 %v398
    %502 = vmatprep.subr.bf16.mxu0 0
    %503 = vmatpush1.bf16.msra.mxu0 %v399
    %504 = vmatprep.subr.bf16.mxu0 0
    %505 = vmatpush1.bf16.msra.mxu0 %v400
    %506 = vmatprep.subr.bf16.mxu0 0
    %507 = vmatpush1.bf16.msra.mxu0 %v401
    %508 = vmatprep.subr.bf16.mxu0 0
    %509 = vmatpush1.bf16.msra.mxu0 %v402
    %510 = vmatprep.subr.bf16.mxu0 0
    %511 = vmatpush1.bf16.msra.mxu0 %v403
    %512 = vmatprep.subr.bf16.mxu0 0
    %513 = vmatpush1.bf16.msra.mxu0 %v404
    %514 = vmatprep.subr.bf16.mxu0 0
    %515 = vmatpush1.bf16.msra.mxu0 %v405
    %516 = vmatprep.subr.bf16.mxu0 0
    %517 = vmatpush1.bf16.msra.mxu0 %v406
    %518 = vmatprep.subr.bf16.mxu0 0
    %519 = vmatpush1.bf16.msra.mxu0 %v407
    %520 = vmatprep.mubr.bf16.mxu0 %v184
    %521 = vmatmul.mubr.bf16.gmra.mrb[0].mxu0 %v170
    %v522 = vpop.f32.mrb[0].mxu0
    %v523 = vadd.f32 %v144, %v522
    %v524 = vpop.f32.mrb[0].mxu0
    %v525 = vpop.f32.mrb[0].mxu0
    %v526 = vpop.f32.mrb[0].mxu0
    %527 = vdwg.mxu0
    %528 = vmatprep.subr.bf16.mxu0 0
    %529 = vmatpush1.bf16.msra.mxu0 %v408
    %530 = vmatprep.subr.bf16.mxu0 0
    %531 = vmatpush1.bf16.msra.mxu0 %v409
    %532 = vmatprep.subr.bf16.mxu0 0
    %533 = vmatpush1.bf16.msra.mxu0 %v410
    %534 = vmatprep.subr.bf16.mxu0 0
    %535 = vmatpush1.bf16.msra.mxu0 %v411
    %536 = vmatprep.subr.bf16.mxu0 0
    %537 = vmatpush1.bf16.msra.mxu0 %v412
    %538 = vmatprep.subr.bf16.mxu0 0
    %539 = vmatpush1.bf16.msra.mxu0 %v413
    %540 = vmatprep.subr.bf16.mxu0 0
    %541 = vmatpush1.bf16.msra.mxu0 %v414
    %542 = vmatprep.subr.bf16.mxu0 0
    %543 = vmatpush1.bf16.msra.mxu0 %v415
    %544 = vmatprep.subr.bf16.mxu0 0
    %545 = vmatpush1.bf16.msra.mxu0 %v416
    %546 = vmatprep.subr.bf16.mxu0 0
    %547 = vmatpush1.bf16.msra.mxu0 %v417
    %548 = vmatprep.subr.bf16.mxu0 0
    %549 = vmatpush1.bf16.msra.mxu0 %v418
    %550 = vmatprep.subr.bf16.mxu0 0
    %551 = vmatpush1.bf16.msra.mxu0 %v419
    %552 = vmatprep.subr.bf16.mxu0 0
    %553 = vmatpush1.bf16.msra.mxu0 %v420
    %554 = vmatprep.subr.bf16.mxu0 0
    %555 = vmatpush1.bf16.msra.mxu0 %v421
    %556 = vmatprep.subr.bf16.mxu0 0
    %557 = vmatpush1.bf16.msra.mxu0 %v422
    %558 = vmatprep.subr.bf16.mxu0 0
    %559 = vmatpush1.bf16.msra.mxu0 %v423
    %560 = vmatprep.mubr.bf16.mxu0 %v193
    %561 = vmatmul.mubr.bf16.gmra.mrb[0].mxu0 %v192
    %v562 = vpop.f32.mrb[0].mxu0
    %v563 = vadd.f32 %v523, %v562
    %v564 = vpop.f32.mrb[0].mxu0
    %v565 = vpop.f32.mrb[0].mxu0
    %v566 = vpop.f32.mrb[0].mxu0
    %567 = vdwg.mxu0
    %568 = vmatprep.subr.bf16.mxu0 0
    %569 = vmatpush1.bf16.msra.mxu0 %v424
    %570 = vmatprep.subr.bf16.mxu0 0
    %571 = vmatpush1.bf16.msra.mxu0 %v425
    %572 = vmatprep.subr.bf16.mxu0 0
    %573 = vmatpush1.bf16.msra.mxu0 %v426
    %574 = vmatprep.subr.bf16.mxu0 0
    %575 = vmatpush1.bf16.msra.mxu0 %v427
    %576 = vmatprep.subr.bf16.mxu0 0
    %577 = vmatpush1.bf16.msra.mxu0 %v428
    %578 = vmatprep.subr.bf16.mxu0 0
    %579 = vmatpush1.bf16.msra.mxu0 %v429
    %580 = vmatprep.subr.bf16.mxu0 0
    %581 = vmatpush1.bf16.msra.mxu0 %v430
    %582 = vmatprep.subr.bf16.mxu0 0
    %583 = vmatpush1.bf16.msra.mxu0 %v431
    %584 = vmatprep.subr.bf16.mxu0 0
    %585 = vmatpush1.bf16.msra.mxu0 %v432
    %586 = vmatprep.subr.bf16.mxu0 0
    %587 = vmatpush1.bf16.msra.mxu0 %v433
    %588 = vmatprep.subr.bf16.mxu0 0
    %589 = vmatpush1.bf16.msra.mxu0 %v434
    %590 = vmatprep.subr.bf16.mxu0 0
    %591 = vmatpush1.bf16.msra.mxu0 %v435
    %592 = vmatprep.subr.bf16.mxu0 0
    %593 = vmatpush1.bf16.msra.mxu0 %v436
    %594 = vmatprep.subr.bf16.mxu0 0
    %595 = vmatpush1.bf16.msra.mxu0 %v437
    %596 = vmatprep.subr.bf16.mxu0 0
    %597 = vmatpush1.bf16.msra.mxu0 %v438
    %598 = vmatprep.subr.bf16.mxu0 0
    %599 = vmatpush1.bf16.msra.mxu0 %v439
    %600 = vmatprep.mubr.bf16.mxu0 %v191
    %601 = vmatmul.mubr.bf16.gmra.mrb[0].mxu0 %v177
    %v602 = vpop.f32.mrb[0].mxu0
    %v603 = vadd.f32 %v563, %v602
    %v604 = vpop.f32.mrb[0].mxu0
    %v605 = vpop.f32.mrb[0].mxu0
    %v606 = vpop.f32.mrb[0].mxu0
    %607 = vdwg.mxu0
    %v608 = vtanh.pop %v603
    %609 = vst [vmem:[#allocation7] sm:$0x3] %v608
    // Predicated region
    $region22: #{tpu_custom_call.1} parent=1 // pred_check
      _
    $region23: #{tpu_custom_call.1} parent=1 // pred_check_branch
      %611 = sbr.rel (0) target = $region25
    $region24: #{tpu_custom_call.1} parent=1 // pred_region
      %s613 = ssub.s32 32, 32
      %614 = vsyncadd [#allocation4], %s613
      %s616 = sshll.u32 [#allocation7], 4
      %s617 = int_to_ptr.vmem [resolvable:$true] %s616
      %619 = dma.vmem_to_hbm [thread:$0]  %s617, 32, %s3, [#allocation4]
    $region25: #{tpu_custom_call.1} parent=1 // pred_fallthru
      _
    // Predicated region
    $region26: #{tpu_custom_call.1} parent=1 // pred_check
      _
    $region27: #{tpu_custom_call.1} parent=1 // pred_check_branch
      %621 = sbr.rel (0) target = $region29
    $region28: #{tpu_custom_call.1} parent=1 // pred_region
      %622 = dma.done [#allocation4], 32
    $region29: #{tpu_custom_call.1} parent=1 // pred_fallthru
      _
    %623 = vsyncpa [#allocation3], 1
    %624 = vsyncpa [#allocation6], 1
    %625 = vsyncpa [#allocation4], 1

</llo_original>
